<compile_context>
chip_gen: v6e
topology: v6e:2x2x1
jax: 0.10.0
libtpu: 0.0.40
codegen_flags: <defaults>
</compile_context>

<pallas_src>
import math

import jax
import jax.numpy as jnp
from jax.experimental import pallas as pl
from jax.experimental.pallas import tpu as pltpu

# Explicit scoped-VMEM budget with headroom; valid on v5e (128 MiB phys),
# v6e (128 MiB) and v7x (64 MiB).
_VMEM_LIMIT = 32 * 1024 * 1024


# ----------------------------------------------------------------------------
# helpers
# ----------------------------------------------------------------------------

def _pick_tile(dim, target, aligns=(8,)):
    """Largest tile <= target that divides `dim` and is a multiple of one of
    `aligns` (tried in order); falls back to the full dimension (always legal)."""
    if dim <= target:
        return dim
    for align in aligns:
        t = (min(target, dim) // align) * align
        while t >= align:
            if dim % t == 0:
                return t
            t -= align
    return dim


# ----------------------------------------------------------------------------
# 1. Fused projection matmul with head-major output: x(M,K) @ w(H,K,Dh) -> (H,M,Dh)
# ----------------------------------------------------------------------------

def pallas_head_proj(x, w_hm, *, out_dtype=jnp.bfloat16):
    """x: (M, K) bf16; w_hm: (H, K, Dh) bf16 -> (H, M, Dh).
    The head split happens in the output BlockSpec, so no XLA transpose is ever
    needed on the activations."""
    M, K = x.shape
    H, K2, Dh = w_hm.shape
    assert K == K2
    tm = _pick_tile(M, 256, (8,))
    tk = _pick_tile(K, 1024, (128, 8))
    # heads per block: keep the effective output width ~512 lanes
    hb = 1
    for cand in range(1, H + 1):
        if H % cand == 0 and cand * Dh <= 512:
            hb = cand
    grid = (M // tm, H // hb, K // tk)

    def kernel(x_ref, w_ref, o_ref, acc_ref):
        @pl.when(pl.program_id(2) == 0)
        def _():
            acc_ref[...] = jnp.zeros_like(acc_ref)

        xb = x_ref[...]
        for hh in range(hb):           # static unroll, hb <= 512 // Dh
            acc_ref[hh] += jnp.dot(xb, w_ref[hh],
                                   preferred_element_type=jnp.float32)

        @pl.when(pl.program_id(2) == pl.num_programs(2) - 1)
        def _():
            o_ref[...] = acc_ref[...].astype(o_ref.dtype)

    return pl.pallas_call(
        kernel,
        out_shape=jax.ShapeDtypeStruct((H, M, Dh), out_dtype),
        grid=grid,
        in_specs=[pl.BlockSpec((tm, tk), lambda i, j, k: (i, k)),
                  pl.BlockSpec((hb, tk, Dh), lambda i, j, k: (j, k, 0))],
        out_specs=pl.BlockSpec((hb, tm, Dh), lambda i, j, k: (j, i, 0)),
        scratch_shapes=[pltpu.VMEM((hb, tm, Dh), jnp.float32)],
        compiler_params=pltpu.CompilerParams(
            dimension_semantics=("parallel", "parallel", "arbitrary"),
            vmem_limit_bytes=_VMEM_LIMIT),
    )(x, w_hm)


# ----------------------------------------------------------------------------
# 2. K-side RoPE + K/V relayout to (B, Hkv, S, Dh)
# ----------------------------------------------------------------------------

def pallas_kv_prep(k_src, v_src, k_head_start, v_head_start, num_kv_heads,
                   cos, sin, rot, *, out_dtype=jnp.bfloat16):
    """k_src / v_src: (H_any, B, Sk, Dh) head-major projection outputs.
    Applies RoPE to the K heads and rewrites K / V as (B, Hkv, Sk, Dh); the
    head-split 'transpose' is expressed by the index maps only."""
    Hkv = num_kv_heads
    _, B, Sk, Dh = k_src.shape
    assert k_head_start % Hkv == 0 and v_head_start % Hkv == 0
    kb = k_head_start // Hkv
    vb = v_head_start // Hkv
    ts = _pick_tile(Sk, 512, (8,))
    grid = (B, Sk // ts)

    def kernel(k_ref, v_ref, cos_ref, sin_ref, rot_ref, ko_ref, vo_ref):
        k = k_ref[:, 0, :, :].astype(jnp.float32)             # (Hkv, ts, Dh)
        cosb = cos_ref[...][None, :, :]
        sinb = sin_ref[...][None, :, :]
        kf = k.reshape(Hkv * ts, Dh)
        # rotate_half as a (Dh, Dh) signed permutation; MXU is idle in this
        # memory-bound pass so the matmul is free on the critical path.
        kr = jnp.dot(kf, rot_ref[...],
                     preferred_element_type=jnp.float32).reshape(Hkv, ts, Dh)
        ko_ref[0] = (k * cosb + kr * sinb).astype(ko_ref.dtype)
        vo_ref[0] = v_ref[:, 0, :, :].astype(vo_ref.dtype)

    return pl.pallas_call(
        kernel,
        out_shape=(jax.ShapeDtypeStruct((B, Hkv, Sk, Dh), out_dtype),
                   jax.ShapeDtypeStruct((B, Hkv, Sk, Dh), out_dtype)),
        grid=grid,
        in_specs=[pl.BlockSpec((Hkv, 1, ts, Dh), lambda b, s: (kb, b, s, 0)),
                  pl.BlockSpec((Hkv, 1, ts, Dh), lambda b, s: (vb, b, s, 0)),
                  pl.BlockSpec((ts, Dh), lambda b, s: (s, 0)),
                  pl.BlockSpec((ts, Dh), lambda b, s: (s, 0)),
                  pl.BlockSpec((Dh, Dh), lambda b, s: (0, 0))],
        out_specs=(pl.BlockSpec((1, Hkv, ts, Dh), lambda b, s: (b, 0, s, 0)),
                   pl.BlockSpec((1, Hkv, ts, Dh), lambda b, s: (b, 0, s, 0))),
        compiler_params=pltpu.CompilerParams(
            dimension_semantics=("parallel", "parallel"),
            vmem_limit_bytes=_VMEM_LIMIT),
    )(k_src, v_src, cos, sin, rot)


# ----------------------------------------------------------------------------
# 3. Flash-style GQA attention with fused Q-side RoPE (+ score scale)
# ----------------------------------------------------------------------------

def _make_flash_gqa_kernel(G, tq, tk, Dh, is_causal):
    rows = G * tq

    def kernel(q_ref, k_ref, v_ref, cos_ref, sin_ref, rot_ref, o_ref,
               q_sc, m_sc, l_sc, acc_sc):
        qi = pl.program_id(2)
        ki = pl.program_id(3)

        @pl.when(ki == 0)
        def _():
            # Fused Q-side RoPE; 1/sqrt(Dh) is folded into the cos/sin tables.
            # Rotated (and scaled) Q lives in VMEM scratch for every KV step.
            q = q_ref[:, 0, :, :].astype(jnp.float32)           # (G, tq, Dh)
            cosb = cos_ref[...][None, :, :]
            sinb = sin_ref[...][None, :, :]
            qf = q.reshape(rows, Dh)
            # rotate_half as a (Dh,Dh) signed permutation: runs once per Q tile
            # (ki==0), ~Dh/Sk of the QK^T MXU work.
            # TODO(synk): pltpu.roll formulation once head_dim is lane-aligned.
            qr = jnp.dot(qf, rot_ref[...],
                         preferred_element_type=jnp.float32).reshape(G, tq, Dh)
            q_sc[...] = (q * cosb + qr * sinb).reshape(rows, Dh).astype(jnp.bfloat16)
            m_sc[...] = jnp.full_like(m_sc, -1e30)
            l_sc[...] = jnp.zeros_like(l_sc)
            acc_sc[...] = jnp.zeros_like(acc_sc)

        def update(apply_mask):
            k = k_ref[0, 0, :, :].astype(jnp.bfloat16)          # (tk, Dh)
            v = v_ref[0, 0, :, :].astype(jnp.bfloat16)          # (tk, Dh)
            s = jax.lax.dot_general(q_sc[...], k, (((1,), (1,)), ((), ())),
                                    preferred_element_type=jnp.float32)
            if apply_mask:
                # rows are (G, tq)-ordered; query position = qi*tq + row-within-tq.
                q_pos = qi * tq + jax.lax.broadcasted_iota(
                    jnp.int32, (G, tq, tk), 1).reshape(rows, tk)
                k_pos = ki * tk + jax.lax.broadcasted_iota(
                    jnp.int32, (rows, tk), 1)
                s = jnp.where(k_pos <= q_pos, s, -1e30)

            m_prev = m_sc[...]
            m_new = jnp.maximum(m_prev, jnp.max(s, axis=-1, keepdims=True))
            alpha = jnp.exp(m_prev - m_new)
            # masked scores sit at -1e30 so exp(s - m_new) underflows to exact 0:
            # no second mask pass on p is required.
            p = jnp.exp(s - m_new)
            l_sc[...] = alpha * l_sc[...] + jnp.sum(p, axis=-1, keepdims=True)
            acc_sc[...] = alpha * acc_sc[...] + jax.lax.dot_general(
                p.astype(jnp.bfloat16), v, (((1,), (0,)), ((), ())),
                preferred_element_type=jnp.float32)
            m_sc[...] = m_new

        if is_causal:
            has_valid = ki * tk <= qi * tq + (tq - 1)    # block has unmasked keys
            on_diag = ki * tk + (tk - 1) > qi * tq       # straddles the diagonal
            # Interior (fully unmasked) blocks skip all iota/compare/select work.
            pl.when(jnp.logical_and(has_valid, jnp.logical_not(on_diag)))(
                lambda: update(False))
            pl.when(jnp.logical_and(has_valid, on_diag))(
                lambda: update(True))
        else:
            update(False)

        @pl.when(ki == pl.num_programs(3) - 1)
        def _():
            inv_l = pl.reciprocal(l_sc[...], approx=True)
            out = acc_sc[...] * inv_l
            o_ref[:, 0, :, :] = out.reshape(G, tq, Dh).astype(o_ref.dtype)

    return kernel


def pallas_flash_gqa(q_src, q_head_start, k, v, cos_q, sin_q, rot, *,
                     group_size, is_causal=False, out_dtype=jnp.bfloat16):
    """q_src: (H_any, B, Sq, Dh) head-major (Q heads start at q_head_start);
    k, v: (B, Hkv, Sk, Dh).  Returns attention output in (Hq, B, Sq, Dh)."""
    G = group_size
    _, B, Sq, Dh = q_src.shape
    _, Hkv, Sk, _ = k.shape
    Hq = Hkv * G
    assert q_head_start % G == 0
    qb0 = q_head_start // G

    # Group-size-aware tiles: rows = G*tq stays <= ~512 so the f32 score/prob
    # temps + double-buffered blocks fit every generation's scoped VMEM.
    tq = _pick_tile(Sq, max(8, 512 // G), (8,))
    tk = _pick_tile(Sk, 512, (128, 8))
    rows = G * tq
    grid = (B, Hkv, Sq // tq, Sk // tk)

    if is_causal:
        def kv_idx(b, h, qi, ki):
            # Clamp to the last block holding any unmasked key: fully-masked KV
            # blocks repeat the previous index so the DMA is elided entirely.
            return (b, h, jnp.minimum(ki, (qi * tq + tq - 1) // tk), 0)
    else:
        def kv_idx(b, h, qi, ki):
            return (b, h, ki, 0)

    kernel = _make_flash_gqa_kernel(G, tq, tk, Dh, is_causal)

    return pl.pallas_call(
        kernel,
        out_shape=jax.ShapeDtypeStruct((Hq, B, Sq, Dh), out_dtype),
        grid=grid,
        in_specs=[pl.BlockSpec((G, 1, tq, Dh),
                               lambda b, h, qi, ki: (qb0 + h, b, qi, 0)),
                  pl.BlockSpec((1, 1, tk, Dh), kv_idx),
                  pl.BlockSpec((1, 1, tk, Dh), kv_idx),
                  pl.BlockSpec((tq, Dh), lambda b, h, qi, ki: (qi, 0)),
                  pl.BlockSpec((tq, Dh), lambda b, h, qi, ki: (qi, 0)),
                  pl.BlockSpec((Dh, Dh), lambda b, h, qi, ki: (0, 0))],
        out_specs=pl.BlockSpec((G, 1, tq, Dh),
                               lambda b, h, qi, ki: (h, b, qi, 0)),
        scratch_shapes=[pltpu.VMEM((rows, Dh), jnp.bfloat16),    # rotated+scaled Q
                        pltpu.VMEM((rows, 1), jnp.float32),      # m
                        pltpu.VMEM((rows, 1), jnp.float32),      # l
                        pltpu.VMEM((rows, Dh), jnp.float32)],    # acc
        compiler_params=pltpu.CompilerParams(
            dimension_semantics=("parallel", "parallel", "parallel", "arbitrary"),
            vmem_limit_bytes=_VMEM_LIMIT),
    )(q_src, k, v, cos_q, sin_q, rot)


# ----------------------------------------------------------------------------
# 4. Output projection over head-major attention output: sum_h attn_h @ Wo_h
# ----------------------------------------------------------------------------

def pallas_out_proj(a_hm, w_hm, *, out_dtype=jnp.float32):
    """a_hm: (H, M, Dh); w_hm: (H, Dh, N) -> (M, N) = sum_h a_hm[h] @ w_hm[h].
    Reads the attention output directly in its head-major layout, so the merge
    transpose never hits HBM (head axis is the reduction grid axis)."""
    H, M, Dh = a_hm.shape
    H2, Dh2, N = w_hm.shape
    assert H == H2 and Dh == Dh2
    tm = _pick_tile(M, 256, (8,))
    tn = _pick_tile(N, 512, (256, 128, 8))
    grid = (M // tm, N // tn, H)

    def kernel(a_ref, w_ref, o_ref, acc_ref):
        @pl.when(pl.program_id(2) == 0)
        def _():
            acc_ref[...] = jnp.zeros_like(acc_ref)

        acc_ref[...] += jnp.dot(a_ref[0], w_ref[0],
                                preferred_element_type=jnp.float32)

        @pl.when(pl.program_id(2) == pl.num_programs(2) - 1)
        def _():
            o_ref[...] = acc_ref[...].astype(o_ref.dtype)

    return pl.pallas_call(
        kernel,
        out_shape=jax.ShapeDtypeStruct((M, N), out_dtype),
        grid=grid,
        in_specs=[pl.BlockSpec((1, tm, Dh), lambda i, j, h: (h, i, 0)),
                  pl.BlockSpec((1, Dh, tn), lambda i, j, h: (h, 0, j))],
        out_specs=pl.BlockSpec((tm, tn), lambda i, j, h: (i, j)),
        scratch_shapes=[pltpu.VMEM((tm, tn), jnp.float32)],
        compiler_params=pltpu.CompilerParams(
            dimension_semantics=("parallel", "parallel", "arbitrary"),
            vmem_limit_bytes=_VMEM_LIMIT),
    )(a_hm, w_hm)


# ----------------------------------------------------------------------------
# Module wrapper (parameter setup + glue)
# ----------------------------------------------------------------------------

class GroupedQueryAttentionPallas:
    def __init__(self, d_model, num_query_heads, num_kv_heads, dropout=0.1,
                 bias=False, rope_percentage=0.5, key=None):
        assert d_model % num_query_heads == 0
        assert num_query_heads % num_kv_heads == 0
        assert not bias, "bias=False only (module default)"
        self.d_model = d_model
        self.num_q_head = num_query_heads
        self.num_kv_head = num_kv_heads
        self.head_dim = d_model // num_query_heads
        self.group_size = num_query_heads // num_kv_heads
        self.rope_dim = int(self.head_dim * rope_percentage)
        self.scale = 1.0 / math.sqrt(self.head_dim)
        self.kv_dim = self.num_kv_head * self.head_dim
        self.num_heads_total = self.num_q_head + 2 * self.num_kv_head

        k1, k2, k3, k4 = jax.random.split(key, 4)
        bound = 1.0 / math.sqrt(d_model)
        Dh = self.head_dim
        # PyTorch-layout (out_features, in_features) f32 master weights (reference).
        self.Wq = jax.random.uniform(k1, (d_model, d_model), jnp.float32, -bound, bound)
        self.Wk = jax.random.uniform(k2, (self.kv_dim, d_model), jnp.float32, -bound, bound)
        self.Wv = jax.random.uniform(k3, (self.kv_dim, d_model), jnp.float32, -bound, bound)
        self.Wo = jax.random.uniform(k4, (d_model, d_model), jnp.float32, -bound, bound)

        def head_major(w):                           # (H*Dh, K) -> (H, K, Dh) bf16
            H = w.shape[0] // Dh
            return jnp.swapaxes(w.reshape(H, Dh, w.shape[1]), 1, 2).astype(jnp.bfloat16)

        # Fused / per-projection head-major bf16 weights, built once at init.
        self.Wqkv_hm = head_major(jnp.concatenate([self.Wq, self.Wk, self.Wv], axis=0))
        self.Wq_hm = head_major(self.Wq)
        self.Wk_hm = head_major(self.Wk)
        self.Wv_hm = head_major(self.Wv)
        # Output projection as (Hq, Dh, D) bf16: out = sum_h attn_h @ Wo_hm[h].
        self.Wo_hm = self.Wo.T.reshape(self.num_q_head, Dh, d_model).astype(jnp.bfloat16)
        # rotate_half as a (Dh, Dh) signed permutation (used by the RoPE kernels).
        self._rot = self._rot_matrix()

    # --- RoPE tables (padded to head_dim so kernels need no channel slicing) ----
    def _rope_tables(self, seq_len):
        rd, Dh = self.rope_dim, self.head_dim
        inv_freq = 1.0 / (10000.0 ** (jnp.arange(0, rd, 2, dtype=jnp.float32)
                                      / max(rd, 1)))
        t = jnp.arange(seq_len, dtype=jnp.float32)
        freqs = jnp.outer(t, inv_freq)                       # (S, rd//2)
        emb = jnp.concatenate([freqs, freqs], axis=-1)       # (S, rd)
        cos = jnp.cos(emb)
        sin = jnp.sin(emb)
        cos_full = jnp.concatenate(
            [cos, jnp.ones((seq_len, Dh - rd), jnp.float32)], axis=-1)
        sin_full = jnp.concatenate(
            [sin, jnp.zeros((seq_len, Dh - rd), jnp.float32)], axis=-1)
        return cos_full, sin_full

    def _rot_matrix(self):
        # x @ P implements rotate_half on the first rope_dim channels.
        rd, Dh = self.rope_dim, self.head_dim
        half = rd // 2
        P = jnp.zeros((Dh, Dh), jnp.float32)
        for i in range(half):
            P = P.at[i + half, i].set(-1.0)
        for i in range(half, rd):
            P = P.at[i - half, i].set(1.0)
        return P

    # --- forward (Pallas) -------------------------------------------------------
    def __call__(self, query, key=None, value=None, attn_mask=None,
                 is_causal=False, need_weigths=False, cache=None):
        # TODO(synk): attn_mask, KV-cache concatenation and need_weigths branches
        # are not implemented (defaults of the reference forward); dropout is
        # treated as identity (eval mode).
        assert attn_mask is None and cache is None and not need_weigths
        if key is None:
            key = query
        if value is None:
            value = key
        B, Sq, D = query.shape
        Sk = key.shape[1]
        Hq, Hkv, Dh, G = self.num_q_head, self.num_kv_head, self.head_dim, self.group_size

        fused = (key is query) and (value is query)
        xq = query.astype(jnp.bfloat16).reshape(B * Sq, D)
        if fused:
            # ONE fused projection, written head-major: (Hq+2*Hkv, B*Sq, Dh).
            # Q / K / V head ranges are selected purely via BlockSpec index maps
            # downstream, so no XLA slice/transpose of activations ever happens.
            qkv = pallas_head_proj(xq, self.Wqkv_hm).reshape(
                self.num_heads_total, B, Sq, Dh)
            q_src, q_h0 = qkv, 0
            k_src, k_h0 = qkv, Hq
            v_src, v_h0 = qkv, Hq + Hkv
        else:
            xk = key.astype(jnp.bfloat16).reshape(B * Sk, D)
            xv = value.astype(jnp.bfloat16).reshape(B * Sk, D)
            q_src = pallas_head_proj(xq, self.Wq_hm).reshape(Hq, B, Sq, Dh)
            k_src = pallas_head_proj(xk, self.Wk_hm).reshape(Hkv, B, Sk, Dh)
            v_src = pallas_head_proj(xv, self.Wv_hm).reshape(Hkv, B, Sk, Dh)
            q_h0 = k_h0 = v_h0 = 0

        # K-side RoPE + K/V relayout to (B, Hkv, S, Dh) for flash and present_kv.
        cos_k, sin_k = self._rope_tables(Sk)
        k_rot, v_kv = pallas_kv_prep(k_src, v_src, k_h0, v_h0, Hkv,
                                     cos_k, sin_k, self._rot)

        # Flash attention; Q-side RoPE + 1/sqrt(Dh) score scale fused in-kernel.
        cos_q, sin_q = self._rope_tables(Sq)
        attn = pallas_flash_gqa(q_src, q_h0, k_rot, v_kv,
                                cos_q * self.scale, sin_q * self.scale, self._rot,
                                group_size=G, is_causal=is_causal)  # (Hq, B, Sq, Dh)

        # Output projection reads the head-major attention output directly.
        output = pallas_out_proj(attn.reshape(Hq, B * Sq, Dh), self.Wo_hm,
                                 out_dtype=query.dtype).reshape(B, Sq, D)

        # present_kv (API parity with the PyTorch module: expanded to Hq heads).
        # TODO(synk): return the un-expanded (B, Hkv, S, Dh) tensors if consumers
        # allow; the repeat materializes group_size x redundant HBM writes.
        present_k = jnp.repeat(k_rot, G, axis=1).astype(query.dtype)
        present_v = jnp.repeat(v_kv, G, axis=1).astype(query.dtype)
        return output, (present_k, present_v)

    # --- pure-JAX f32 reference (for verification) -------------------------------
    def reference(self, query, key=None, value=None, is_causal=False):
        if key is None:
            key = query
        if value is None:
            value = key
        B, Sq, D = query.shape
        Sk = key.shape[1]
        Hq, Hkv, Dh, rd = self.num_q_head, self.num_kv_head, self.head_dim, self.rope_dim

        q = query @ self.Wq.T
        k = key @ self.Wk.T
        v = value @ self.Wv.T
        qh = q.reshape(B, Sq, Hq, Dh).transpose(0, 2, 1, 3)
        kh = k.reshape(B, Sk, Hkv, Dh).transpose(0, 2, 1, 3)
        vh = v.reshape(B, Sk, Hkv, Dh).transpose(0, 2, 1, 3)

        def rope(x):
            seq = x.shape[-2]
            inv_freq = 1.0 / (10000.0 ** (jnp.arange(0, rd, 2, dtype=jnp.float32)
                                          / max(rd, 1)))
            t = jnp.arange(seq, dtype=jnp.float32)
            freqs = jnp.outer(t, inv_freq)
            emb = jnp.concatenate([freqs, freqs], axis=-1)
            cos, sin = jnp.cos(emb), jnp.sin(emb)
            xr, xp = x[..., :rd], x[..., rd:]
            half = rd // 2
            rot = jnp.concatenate([-xr[..., half:], xr[..., :half]], axis=-1)
            xr = xr * cos + rot * sin
            return jnp.concatenate([xr, xp], axis=-1)

        if rd > 0:
            qh, kh = rope(qh), rope(kh)
        k_exp = jnp.repeat(kh, self.group_size, axis=1)
        v_exp = jnp.repeat(vh, self.group_size, axis=1)
        s = jnp.einsum('bhqd,bhkd->bhqk', qh, k_exp,
                       precision=jax.lax.Precision.HIGHEST) * self.scale
        if is_causal:
            mask = jnp.tril(jnp.ones((Sq, Sk), bool))
            s = jnp.where(mask, s, -jnp.inf)
        p = jax.nn.softmax(s, axis=-1)
        o = jnp.einsum('bhqk,bhkd->bhqd', p, v_exp,
                       precision=jax.lax.Precision.HIGHEST)
        o = o.transpose(0, 2, 1, 3).reshape(B, Sq, D)
        return o @ self.Wo.T, (k_exp, v_exp)


# ----------------------------------------------------------------------------
# Demo / self-check
# ----------------------------------------------------------------------------

if __name__ == "__main__":
    root = jax.random.PRNGKey(0)
    k_x, k_params = jax.random.split(root)

    B, S, d_model = 2, 8, 32
    num_q_heads, num_kv_heads = 4, 2
    head_dim = d_model // num_q_heads

    x = jax.random.normal(k_x, (B, S, d_model), jnp.float32)

    mod = GroupedQueryAttentionPallas(
        d_model=d_model, num_query_heads=num_q_heads, num_kv_heads=num_kv_heads,
        dropout=0.1, bias=False, rope_percentage=0.5, key=k_params)

    # Non-causal forward
    out, (k_exp, v_exp) = mod(x)
    jax.block_until_ready((out, k_exp, v_exp))
    assert out.shape == (B, S, d_model)
    assert k_exp.shape == (B, num_q_heads, S, head_dim)
    assert v_exp.shape == (B, num_q_heads, S, head_dim)

    ref_out, (ref_k, ref_v) = mod.reference(x)
    # Tolerances sized for bf16 weights / activations with f32 accumulation.
    assert jnp.allclose(out, ref_out, atol=2e-2, rtol=2e-2), "output mismatch"
    assert jnp.allclose(k_exp, ref_k, atol=2e-2, rtol=2e-2), "present K mismatch"
    assert jnp.allclose(v_exp, ref_v, atol=2e-2, rtol=2e-2), "present V mismatch"

    # Causal forward (exercises masked / DMA-elided / block-skipping paths)
    out_c, _ = mod(x, is_causal=True)
    jax.block_until_ready(out_c)
    ref_out_c, _ = mod.reference(x, is_causal=True)
    assert jnp.allclose(out_c, ref_out_c, atol=2e-2, rtol=2e-2), "causal output mismatch"

    print("KERNEL_OK")
</pallas_src>

<mosaic_0001>
module attributes {stable_mosaic.version = 11 : i64} {
  func.func @kernel(%arg0: i32, %arg1: i32, %arg2: i32, %arg3: memref<16x32xbf16, #tpu.memory_space<vmem>>, %arg4: memref<8x32x8xbf16, #tpu.memory_space<vmem>>, %arg5: memref<8x16x8xbf16, #tpu.memory_space<vmem>>, %arg6: memref<8x16x8xf32, #tpu.memory_space<vmem>>) attributes {dimension_semantics = [#tpu.dimension_semantics<parallel>, #tpu.dimension_semantics<parallel>, #tpu.dimension_semantics<arbitrary>], iteration_bounds = array<i64: 1, 1, 1>, scalar_prefetch = 0 : i64, scratch_operands = 1 : i64, tpu.core_type = #tpu.core_type<tc>, window_params = [{transform_indices = @transform_0, window_bounds = array<i64: 16, 32>}, {transform_indices = @transform_1, window_bounds = array<i64: 8, 32, 8>}, {transform_indices = @transform_2, window_bounds = array<i64: 8, 16, 8>}]} {
    %c0_i32 = arith.constant 0 : i32
    %0 = arith.cmpi eq, %arg2, %c0_i32 : i32
    %1 = arith.extui %0 : i1 to i32
    %c0_i32_0 = arith.constant 0 : i32
    %2 = arith.cmpi ne, %1, %c0_i32_0 : i32
    scf.if %2 {
      %cst_76 = arith.constant 0.000000e+00 : f32
      %79 = vector.broadcast %cst_76 : f32 to vector<8x16x8xf32>
      %c0_77 = arith.constant 0 : index
      %c0_78 = arith.constant 0 : index
      %c0_79 = arith.constant 0 : index
      %80 = vector.load %arg6[%c0_77, %c0_78, %c0_79] : memref<8x16x8xf32, #tpu.memory_space<vmem>>, vector<8x16x8xf32>
      tpu.vector_store %arg6[%c0_77, %c0_78, %c0_79], %79 {strides = array<i32>} : memref<8x16x8xf32, #tpu.memory_space<vmem>>, vector<8x16x8xf32>,
    } else {
    }
    %c0 = arith.constant 0 : index
    %c0_1 = arith.constant 0 : index
    %3 = vector.load %arg3[%c0, %c0_1] : memref<16x32xbf16, #tpu.memory_space<vmem>>, vector<16x32xbf16>
    %c0_2 = arith.constant 0 : index
    %c0_3 = arith.constant 0 : index
    %c0_4 = arith.constant 0 : index
    %4 = vector.load %arg6[%c0_2, %c0_3, %c0_4] : memref<8x16x8xf32, #tpu.memory_space<vmem>>, vector<1x16x8xf32>
    %5 = vector.shape_cast %4 : vector<1x16x8xf32> to vector<16x8xf32>
    %c0_5 = arith.constant 0 : index
    %c0_6 = arith.constant 0 : index
    %c0_7 = arith.constant 0 : index
    %6 = vector.load %arg4[%c0_5, %c0_6, %c0_7] : memref<8x32x8xbf16, #tpu.memory_space<vmem>>, vector<1x32x8xbf16>
    %7 = vector.shape_cast %6 : vector<1x32x8xbf16> to vector<32x8xbf16>
    %cst = arith.constant dense<0.000000e+00> : vector<16x8xf32>
    %8 = tpu.matmul %3, %7, %cst {dimension_numbers = #tpu.dot_dimension_numbers<[1], [0], [0], [1], [0, 0, 1, 1], [], []>} : vector<16x32xbf16>, vector<32x8xbf16>, vector<16x8xf32> -> vector<16x8xf32>
    %9 = arith.addf %5, %8 : vector<16x8xf32>
    %c0_8 = arith.constant 0 : index
    %c0_9 = arith.constant 0 : index
    %c0_10 = arith.constant 0 : index
    %10 = vector.load %arg6[%c0_8, %c0_9, %c0_10] : memref<8x16x8xf32, #tpu.memory_space<vmem>>, vector<1x16x8xf32>
    %11 = vector.shape_cast %10 : vector<1x16x8xf32> to vector<16x8xf32>
    %12 = vector.shape_cast %9 : vector<16x8xf32> to vector<1x16x8xf32>
    tpu.vector_store %arg6[%c0_8, %c0_9, %c0_10], %12 {strides = array<i32>} : memref<8x16x8xf32, #tpu.memory_space<vmem>>, vector<1x16x8xf32>,
    %c1 = arith.constant 1 : index
    %c0_11 = arith.constant 0 : index
    %c0_12 = arith.constant 0 : index
    %13 = vector.load %arg6[%c1, %c0_11, %c0_12] : memref<8x16x8xf32, #tpu.memory_space<vmem>>, vector<1x16x8xf32>
    %14 = vector.shape_cast %13 : vector<1x16x8xf32> to vector<16x8xf32>
    %c1_13 = arith.constant 1 : index
    %c0_14 = arith.constant 0 : index
    %c0_15 = arith.constant 0 : index
    %15 = vector.load %arg4[%c1_13, %c0_14, %c0_15] : memref<8x32x8xbf16, #tpu.memory_space<vmem>>, vector<1x32x8xbf16>
    %16 = vector.shape_cast %15 : vector<1x32x8xbf16> to vector<32x8xbf16>
    %cst_16 = arith.constant dense<0.000000e+00> : vector<16x8xf32>
    %17 = tpu.matmul %3, %16, %cst_16 {dimension_numbers = #tpu.dot_dimension_numbers<[1], [0], [0], [1], [0, 0, 1, 1], [], []>} : vector<16x32xbf16>, vector<32x8xbf16>, vector<16x8xf32> -> vector<16x8xf32>
    %18 = arith.addf %14, %17 : vector<16x8xf32>
    %c1_17 = arith.constant 1 : index
    %c0_18 = arith.constant 0 : index
    %c0_19 = arith.constant 0 : index
    %19 = vector.load %arg6[%c1_17, %c0_18, %c0_19] : memref<8x16x8xf32, #tpu.memory_space<vmem>>, vector<1x16x8xf32>
    %20 = vector.shape_cast %19 : vector<1x16x8xf32> to vector<16x8xf32>
    %21 = vector.shape_cast %18 : vector<16x8xf32> to vector<1x16x8xf32>
    tpu.vector_store %arg6[%c1_17, %c0_18, %c0_19], %21 {strides = array<i32>} : memref<8x16x8xf32, #tpu.memory_space<vmem>>, vector<1x16x8xf32>,
    %c2 = arith.constant 2 : index
    %c0_20 = arith.constant 0 : index
    %c0_21 = arith.constant 0 : index
    %22 = vector.load %arg6[%c2, %c0_20, %c0_21] : memref<8x16x8xf32, #tpu.memory_space<vmem>>, vector<1x16x8xf32>
    %23 = vector.shape_cast %22 : vector<1x16x8xf32> to vector<16x8xf32>
    %c2_22 = arith.constant 2 : index
    %c0_23 = arith.constant 0 : index
    %c0_24 = arith.constant 0 : index
    %24 = vector.load %arg4[%c2_22, %c0_23, %c0_24] : memref<8x32x8xbf16, #tpu.memory_space<vmem>>, vector<1x32x8xbf16>
    %25 = vector.shape_cast %24 : vector<1x32x8xbf16> to vector<32x8xbf16>
    %cst_25 = arith.constant dense<0.000000e+00> : vector<16x8xf32>
    %26 = tpu.matmul %3, %25, %cst_25 {dimension_numbers = #tpu.dot_dimension_numbers<[1], [0], [0], [1], [0, 0, 1, 1], [], []>} : vector<16x32xbf16>, vector<32x8xbf16>, vector<16x8xf32> -> vector<16x8xf32>
    %27 = arith.addf %23, %26 : vector<16x8xf32>
    %c2_26 = arith.constant 2 : index
    %c0_27 = arith.constant 0 : index
    %c0_28 = arith.constant 0 : index
    %28 = vector.load %arg6[%c2_26, %c0_27, %c0_28] : memref<8x16x8xf32, #tpu.memory_space<vmem>>, vector<1x16x8xf32>
    %29 = vector.shape_cast %28 : vector<1x16x8xf32> to vector<16x8xf32>
    %30 = vector.shape_cast %27 : vector<16x8xf32> to vector<1x16x8xf32>
    tpu.vector_store %arg6[%c2_26, %c0_27, %c0_28], %30 {strides = array<i32>} : memref<8x16x8xf32, #tpu.memory_space<vmem>>, vector<1x16x8xf32>,
    %c3 = arith.constant 3 : index
    %c0_29 = arith.constant 0 : index
    %c0_30 = arith.constant 0 : index
    %31 = vector.load %arg6[%c3, %c0_29, %c0_30] : memref<8x16x8xf32, #tpu.memory_space<vmem>>, vector<1x16x8xf32>
    %32 = vector.shape_cast %31 : vector<1x16x8xf32> to vector<16x8xf32>
    %c3_31 = arith.constant 3 : index
    %c0_32 = arith.constant 0 : index
    %c0_33 = arith.constant 0 : index
    %33 = vector.load %arg4[%c3_31, %c0_32, %c0_33] : memref<8x32x8xbf16, #tpu.memory_space<vmem>>, vector<1x32x8xbf16>
    %34 = vector.shape_cast %33 : vector<1x32x8xbf16> to vector<32x8xbf16>
    %cst_34 = arith.constant dense<0.000000e+00> : vector<16x8xf32>
    %35 = tpu.matmul %3, %34, %cst_34 {dimension_numbers = #tpu.dot_dimension_numbers<[1], [0], [0], [1], [0, 0, 1, 1], [], []>} : vector<16x32xbf16>, vector<32x8xbf16>, vector<16x8xf32> -> vector<16x8xf32>
    %36 = arith.addf %32, %35 : vector<16x8xf32>
    %c3_35 = arith.constant 3 : index
    %c0_36 = arith.constant 0 : index
    %c0_37 = arith.constant 0 : index
    %37 = vector.load %arg6[%c3_35, %c0_36, %c0_37] : memref<8x16x8xf32, #tpu.memory_space<vmem>>, vector<1x16x8xf32>
    %38 = vector.shape_cast %37 : vector<1x16x8xf32> to vector<16x8xf32>
    %39 = vector.shape_cast %36 : vector<16x8xf32> to vector<1x16x8xf32>
    tpu.vector_store %arg6[%c3_35, %c0_36, %c0_37], %39 {strides = array<i32>} : memref<8x16x8xf32, #tpu.memory_space<vmem>>, vector<1x16x8xf32>,
    %c4 = arith.constant 4 : index
    %c0_38 = arith.constant 0 : index
    %c0_39 = arith.constant 0 : index
    %40 = vector.load %arg6[%c4, %c0_38, %c0_39] : memref<8x16x8xf32, #tpu.memory_space<vmem>>, vector<1x16x8xf32>
    %41 = vector.shape_cast %40 : vector<1x16x8xf32> to vector<16x8xf32>
    %c4_40 = arith.constant 4 : index
    %c0_41 = arith.constant 0 : index
    %c0_42 = arith.constant 0 : index
    %42 = vector.load %arg4[%c4_40, %c0_41, %c0_42] : memref<8x32x8xbf16, #tpu.memory_space<vmem>>, vector<1x32x8xbf16>
    %43 = vector.shape_cast %42 : vector<1x32x8xbf16> to vector<32x8xbf16>
    %cst_43 = arith.constant dense<0.000000e+00> : vector<16x8xf32>
    %44 = tpu.matmul %3, %43, %cst_43 {dimension_numbers = #tpu.dot_dimension_numbers<[1], [0], [0], [1], [0, 0, 1, 1], [], []>} : vector<16x32xbf16>, vector<32x8xbf16>, vector<16x8xf32> -> vector<16x8xf32>
    %45 = arith.addf %41, %44 : vector<16x8xf32>
    %c4_44 = arith.constant 4 : index
    %c0_45 = arith.constant 0 : index
    %c0_46 = arith.constant 0 : index
    %46 = vector.load %arg6[%c4_44, %c0_45, %c0_46] : memref<8x16x8xf32, #tpu.memory_space<vmem>>, vector<1x16x8xf32>
    %47 = vector.shape_cast %46 : vector<1x16x8xf32> to vector<16x8xf32>
    %48 = vector.shape_cast %45 : vector<16x8xf32> to vector<1x16x8xf32>
    tpu.vector_store %arg6[%c4_44, %c0_45, %c0_46], %48 {strides = array<i32>} : memref<8x16x8xf32, #tpu.memory_space<vmem>>, vector<1x16x8xf32>,
    %c5 = arith.constant 5 : index
    %c0_47 = arith.constant 0 : index
    %c0_48 = arith.constant 0 : index
    %49 = vector.load %arg6[%c5, %c0_47, %c0_48] : memref<8x16x8xf32, #tpu.memory_space<vmem>>, vector<1x16x8xf32>
    %50 = vector.shape_cast %49 : vector<1x16x8xf32> to vector<16x8xf32>
    %c5_49 = arith.constant 5 : index
    %c0_50 = arith.constant 0 : index
    %c0_51 = arith.constant 0 : index
    %51 = vector.load %arg4[%c5_49, %c0_50, %c0_51] : memref<8x32x8xbf16, #tpu.memory_space<vmem>>, vector<1x32x8xbf16>
    %52 = vector.shape_cast %51 : vector<1x32x8xbf16> to vector<32x8xbf16>
    %cst_52 = arith.constant dense<0.000000e+00> : vector<16x8xf32>
    %53 = tpu.matmul %3, %52, %cst_52 {dimension_numbers = #tpu.dot_dimension_numbers<[1], [0], [0], [1], [0, 0, 1, 1], [], []>} : vector<16x32xbf16>, vector<32x8xbf16>, vector<16x8xf32> -> vector<16x8xf32>
    %54 = arith.addf %50, %53 : vector<16x8xf32>
    %c5_53 = arith.constant 5 : index
    %c0_54 = arith.constant 0 : index
    %c0_55 = arith.constant 0 : index
    %55 = vector.load %arg6[%c5_53, %c0_54, %c0_55] : memref<8x16x8xf32, #tpu.memory_space<vmem>>, vector<1x16x8xf32>
    %56 = vector.shape_cast %55 : vector<1x16x8xf32> to vector<16x8xf32>
    %57 = vector.shape_cast %54 : vector<16x8xf32> to vector<1x16x8xf32>
    tpu.vector_store %arg6[%c5_53, %c0_54, %c0_55], %57 {strides = array<i32>} : memref<8x16x8xf32, #tpu.memory_space<vmem>>, vector<1x16x8xf32>,
    %c6 = arith.constant 6 : index
    %c0_56 = arith.constant 0 : index
    %c0_57 = arith.constant 0 : index
    %58 = vector.load %arg6[%c6, %c0_56, %c0_57] : memref<8x16x8xf32, #tpu.memory_space<vmem>>, vector<1x16x8xf32>
    %59 = vector.shape_cast %58 : vector<1x16x8xf32> to vector<16x8xf32>
    %c6_58 = arith.constant 6 : index
    %c0_59 = arith.constant 0 : index
    %c0_60 = arith.constant 0 : index
    %60 = vector.load %arg4[%c6_58, %c0_59, %c0_60] : memref<8x32x8xbf16, #tpu.memory_space<vmem>>, vector<1x32x8xbf16>
    %61 = vector.shape_cast %60 : vector<1x32x8xbf16> to vector<32x8xbf16>
    %cst_61 = arith.constant dense<0.000000e+00> : vector<16x8xf32>
    %62 = tpu.matmul %3, %61, %cst_61 {dimension_numbers = #tpu.dot_dimension_numbers<[1], [0], [0], [1], [0, 0, 1, 1], [], []>} : vector<16x32xbf16>, vector<32x8xbf16>, vector<16x8xf32> -> vector<16x8xf32>
    %63 = arith.addf %59, %62 : vector<16x8xf32>
    %c6_62 = arith.constant 6 : index
    %c0_63 = arith.constant 0 : index
    %c0_64 = arith.constant 0 : index
    %64 = vector.load %arg6[%c6_62, %c0_63, %c0_64] : memref<8x16x8xf32, #tpu.memory_space<vmem>>, vector<1x16x8xf32>
    %65 = vector.shape_cast %64 : vector<1x16x8xf32> to vector<16x8xf32>
    %66 = vector.shape_cast %63 : vector<16x8xf32> to vector<1x16x8xf32>
    tpu.vector_store %arg6[%c6_62, %c0_63, %c0_64], %66 {strides = array<i32>} : memref<8x16x8xf32, #tpu.memory_space<vmem>>, vector<1x16x8xf32>,
    %c7 = arith.constant 7 : index
    %c0_65 = arith.constant 0 : index
    %c0_66 = arith.constant 0 : index
    %67 = vector.load %arg6[%c7, %c0_65, %c0_66] : memref<8x16x8xf32, #tpu.memory_space<vmem>>, vector<1x16x8xf32>
    %68 = vector.shape_cast %67 : vector<1x16x8xf32> to vector<16x8xf32>
    %c7_67 = arith.constant 7 : index
    %c0_68 = arith.constant 0 : index
    %c0_69 = arith.constant 0 : index
    %69 = vector.load %arg4[%c7_67, %c0_68, %c0_69] : memref<8x32x8xbf16, #tpu.memory_space<vmem>>, vector<1x32x8xbf16>
    %70 = vector.shape_cast %69 : vector<1x32x8xbf16> to vector<32x8xbf16>
    %cst_70 = arith.constant dense<0.000000e+00> : vector<16x8xf32>
    %71 = tpu.matmul %3, %70, %cst_70 {dimension_numbers = #tpu.dot_dimension_numbers<[1], [0], [0], [1], [0, 0, 1, 1], [], []>} : vector<16x32xbf16>, vector<32x8xbf16>, vector<16x8xf32> -> vector<16x8xf32>
    %72 = arith.addf %68, %71 : vector<16x8xf32>
    %c7_71 = arith.constant 7 : index
    %c0_72 = arith.constant 0 : index
    %c0_73 = arith.constant 0 : index
    %73 = vector.load %arg6[%c7_71, %c0_72, %c0_73] : memref<8x16x8xf32, #tpu.memory_space<vmem>>, vector<1x16x8xf32>
    %74 = vector.shape_cast %73 : vector<1x16x8xf32> to vector<16x8xf32>
    %75 = vector.shape_cast %72 : vector<16x8xf32> to vector<1x16x8xf32>
    tpu.vector_store %arg6[%c7_71, %c0_72, %c0_73], %75 {strides = array<i32>} : memref<8x16x8xf32, #tpu.memory_space<vmem>>, vector<1x16x8xf32>,
    %c0_i32_74 = arith.constant 0 : i32
    %76 = arith.cmpi eq, %arg2, %c0_i32_74 : i32
    %77 = arith.extui %76 : i1 to i32
    %c0_i32_75 = arith.constant 0 : i32
    %78 = arith.cmpi ne, %77, %c0_i32_75 : i32
    scf.if %78 {
      %c0_76 = arith.constant 0 : index
      %c0_77 = arith.constant 0 : index
      %c0_78 = arith.constant 0 : index
      %79 = vector.load %arg6[%c0_76, %c0_77, %c0_78] : memref<8x16x8xf32, #tpu.memory_space<vmem>>, vector<8x16x8xf32>
      %80 = arith.truncf %79 : vector<8x16x8xf32> to vector<8x16x8xbf16>
      %c0_79 = arith.constant 0 : index
      %c0_80 = arith.constant 0 : index
      %c0_81 = arith.constant 0 : index
      %81 = vector.load %arg5[%c0_79, %c0_80, %c0_81] : memref<8x16x8xbf16, #tpu.memory_space<vmem>>, vector<8x16x8xbf16>
      tpu.vector_store %arg5[%c0_79, %c0_80, %c0_81], %80 {strides = array<i32>} : memref<8x16x8xbf16, #tpu.memory_space<vmem>>, vector<8x16x8xbf16>,
    } else {
    }
    return
  }
  func.func @transform_0(%arg0: i32, %arg1: i32, %arg2: i32) -> (i32, i32) {
    %c0_i32 = arith.constant 0 : i32
    return %arg0, %arg2 : i32, i32
  }
  func.func @transform_1(%arg0: i32, %arg1: i32, %arg2: i32) -> (i32, i32, i32) {
    %c0_i32 = arith.constant 0 : i32
    %c0_i32_0 = arith.constant 0 : i32
    return %arg1, %arg2, %c0_i32 : i32, i32, i32
  }
  func.func @transform_2(%arg0: i32, %arg1: i32, %arg2: i32) -> (i32, i32, i32) {
    %c0_i32 = arith.constant 0 : i32
    %c0_i32_0 = arith.constant 0 : i32
    return %arg1, %arg0, %c0_i32 : i32, i32, i32
  }
}

</mosaic_0001>

<llo_original>
// kernel: tpu_custom_call.1
$region0: #{tpu_custom_call.1}
  #allocation0 [shape = 'u32[]', space=smem, size = 0x4, offset = 0x4, fixed_abs, tag = 'smem constant byte address 0x4 - core index']
  #allocation1 [shape = 'u32[144,128]{1,0:T(1,128)}', space=vmem, size = 0x12000, scoped, tag = 'internal scratch']
  #allocation2 [shape = 'f32[8,16,8]{2,1,0:T(8,128)}', space=vmem, size = 0x10000, scoped, tag = 'scratch operand']
  %s0 = inlined_call_operand.vmem [shape: bf16[16,32], index: 0, kind: input, shape index: {}]
  %s1 = inlined_call_operand.vmem [shape: bf16[8,32,8], index: 1, kind: input, shape index: {}]
  %s2 = inlined_call_operand.vmem [shape: bf16[8,16,8], index: 2, kind: output, shape index: {}]
  %s3 = sld [smem:[#allocation0]]
  $region26: #{tpu_custom_call.1} parent=0
    _
  %s5 = ssub.s32 1, %s3
  %s6 = scalar_select 0, %s5, %s3
  // Predicated region
  $region2: #{tpu_custom_call.1} parent=0 // pred_check
    _
  $region3: #{tpu_custom_call.1} parent=0 // pred_check_branch
    %8 = sbr.rel (0) target = $region5
  $region4: #{tpu_custom_call.1} parent=0 // pred_region
    _
  $region5: #{tpu_custom_call.1} parent=0 // pred_fallthru
    _
  // Predicated region
  $region6: #{tpu_custom_call.1} parent=0 // pred_check
    _
  $region7: #{tpu_custom_call.1} parent=0 // pred_check_branch
    %10 = sbr.rel (0) target = $region9
  $region8: #{tpu_custom_call.1} parent=0 // pred_region
    _
  $region9: #{tpu_custom_call.1} parent=0 // pred_fallthru
    _
  %p12 = scmp.eq.s32.totalorder 0, 0
  // Predicated region
  $region10: #{tpu_custom_call.1} parent=0 // pred_check
    %p13 = pneg %p12
  $region11: #{tpu_custom_call.1} parent=0 // pred_check_branch
    %15 = sbr.rel (%p13) target = $region13
  $region12: #{tpu_custom_call.1} parent=0 // pred_region
    %vm16 = vcmask 64512
    %17 = vst.msk [vmem:[#allocation2] sm:$0xff] %vm16, 0.0
    %18 = vst.msk [vmem:[#allocation2 + $0x8] sm:$0xff] %vm16, 0.0
    %19 = vst.msk [vmem:[#allocation2 + $0x10] sm:$0xff] %vm16, 0.0
    %20 = vst.msk [vmem:[#allocation2 + $0x18] sm:$0xff] %vm16, 0.0
    %21 = vst.msk [vmem:[#allocation2 + $0x20] sm:$0xff] %vm16, 0.0
    %22 = vst.msk [vmem:[#allocation2 + $0x28] sm:$0xff] %vm16, 0.0
    %23 = vst.msk [vmem:[#allocation2 + $0x30] sm:$0xff] %vm16, 0.0
    %24 = vst.msk [vmem:[#allocation2 + $0x38] sm:$0xff] %vm16, 0.0
    %25 = vst.msk [vmem:[#allocation2 + $0x40] sm:$0xff] %vm16, 0.0
    %26 = vst.msk [vmem:[#allocation2 + $0x48] sm:$0xff] %vm16, 0.0
    %27 = vst.msk [vmem:[#allocation2 + $0x50] sm:$0xff] %vm16, 0.0
    %28 = vst.msk [vmem:[#allocation2 + $0x58] sm:$0xff] %vm16, 0.0
    %29 = vst.msk [vmem:[#allocation2 + $0x60] sm:$0xff] %vm16, 0.0
    %30 = vst.msk [vmem:[#allocation2 + $0x68] sm:$0xff] %vm16, 0.0
    %31 = vst.msk [vmem:[#allocation2 + $0x70] sm:$0xff] %vm16, 0.0
    %32 = vst.msk [vmem:[#allocation2 + $0x78] sm:$0xff] %vm16, 0.0
  $region13: #{tpu_custom_call.1} parent=0 // pred_fallthru
    _
  %v33 = vld [vmem:[%s0] sm:$0xf]
  %v34 = vld [vmem:[%s0 + $0x4] sm:$0xf]
  %v35 = vld [vmem:[#allocation2] sm:$0xff]
  %v36 = vld [vmem:[#allocation2 + $0x8] sm:$0xff]
  %v37 = vld [vmem:[%s1] sm:$0xf]
  %v38 = vld [vmem:[%s1 + $0x4] sm:$0xf]
  %v39 = vld [vmem:[%s1 + $0x8] sm:$0xf]
  %v40 = vld [vmem:[%s1 + $0xc] sm:$0xf]
  %v43 = vunpack.c.l.b16 %v33
  %v44 = vunpack.c.l.b16 %v34
  %v45 = vpack.c.b16 %v44, %v43
  %v50 = vunpack.c.l.b16 %v37
  %v51 = vunpack.c.l.b16 %v38
  %v52 = vunpack.c.l.b16 %v39
  %v53 = vunpack.c.l.b16 %v40
  %v54 = vpack.c.b16 %v51, %v50
  %v55 = vpack.c.b16 %v53, %v52
  %vm58 = vcmask 261120
  %v60 = vsel %vm58, %v45, 0
  %62 = vmatprep.subr.bf16.mxu0 0
  %63 = vmatpush1.bf16.msra.mxu0 0
  %64 = vmatprep.subr.bf16.mxu0 0
  %65 = vmatpush1.bf16.msra.mxu0 0
  %66 = vmatprep.subr.bf16.mxu0 0
  %67 = vmatpush1.bf16.msra.mxu0 0
  %68 = vmatprep.subr.bf16.mxu0 0
  %69 = vmatpush1.bf16.msra.mxu0 0
  %70 = vmatprep.subr.bf16.mxu0 0
  %71 = vmatpush1.bf16.msra.mxu0 0
  %72 = vmatprep.subr.bf16.mxu0 0
  %73 = vmatpush1.bf16.msra.mxu0 0
  %74 = vmatprep.subr.bf16.mxu0 0
  %75 = vmatpush1.bf16.msra.mxu0 %v55
  %76 = vmatprep.subr.bf16.mxu0 0
  %77 = vmatpush1.bf16.msra.mxu0 %v54
  %78 = vmatprep.subr.bf16.mxu0 0
  %79 = vmatpush2.bf16.msra.mxu0 0
  %80 = vmatprep.subr.bf16.mxu0 0
  %81 = vmatpush2.bf16.msra.mxu0 0
  %82 = vmatprep.subr.bf16.mxu0 0
  %83 = vmatpush2.bf16.msra.mxu0 0
  %84 = vmatprep.subr.bf16.mxu0 0
  %85 = vmatpush2.bf16.msra.mxu0 0
  %86 = vmatprep.subr.bf16.mxu0 0
  %87 = vmatpush2.bf16.msra.mxu0 0
  %88 = vmatprep.subr.bf16.mxu0 0
  %89 = vmatpush2.bf16.msra.mxu0 0
  %90 = vmatprep.subr.bf16.mxu0 0
  %91 = vmatpush2.bf16.msra.mxu0 0
  %92 = vmatprep.subr.bf16.mxu0 0
  %93 = vmatpush2.bf16.msra.mxu0 0
  %94 = vmatprep.mubr.bf16.mxu0 0
  %95 = vmatmul.mubr.bf16.gmra.mxu0 %v60
  %v96 = vpop.f32.mrf.mxu0
  %v97 = vadd.f32 0.0, %v96
  %v98 = vpop.f32.mrf.mxu0
  %v99 = vpop.f32.mrf.mxu0
  %v100 = vadd.f32 0.0, %v99
  %v101 = vpop.f32.mrf.mxu0
  %102 = vdwg.mxu0
  %v103 = vadd.f32 %v35, %v97
  %v104 = vadd.f32 %v36, %v100
  %vm105 = vcmask 64512
  %106 = vst.msk [vmem:[#allocation2] sm:$0xff] %vm105, %v103
  %107 = vst.msk [vmem:[#allocation2 + $0x8] sm:$0xff] %vm105, %v104
  %s108 = scalar_lea.vmem [#allocation2], 16
  %v109 = vld [vmem:[%s108] sm:$0xff]
  %v110 = vld [vmem:[%s108 + $0x8] sm:$0xff]
  %s111 = scalar_lea.vmem %s1, 16
  %v112 = vld [vmem:[%s111] sm:$0xf]
  %v113 = vld [vmem:[%s111 + $0x4] sm:$0xf]
  %v114 = vld [vmem:[%s111 + $0x8] sm:$0xf]
  %v115 = vld [vmem:[%s111 + $0xc] sm:$0xf]
  %v120 = vunpack.c.l.b16 %v112
  %v121 = vunpack.c.l.b16 %v113
  %v122 = vunpack.c.l.b16 %v114
  %v123 = vunpack.c.l.b16 %v115
  %v124 = vpack.c.b16 %v121, %v120
  %v125 = vpack.c.b16 %v123, %v122
  %128 = vmatprep.subr.bf16.mxu0 0
  %129 = vmatpush1.bf16.msra.mxu0 0
  %130 = vmatprep.subr.bf16.mxu0 0
  %131 = vmatpush1.bf16.msra.mxu0 0
  %132 = vmatprep.subr.bf16.mxu0 0
  %133 = vmatpush1.bf16.msra.mxu0 0
  %134 = vmatprep.subr.bf16.mxu0 0
  %135 = vmatpush1.bf16.msra.mxu0 0
  %136 = vmatprep.subr.bf16.mxu0 0
  %137 = vmatpush1.bf16.msra.mxu0 0
  %138 = vmatprep.subr.bf16.mxu0 0
  %139 = vmatpush1.bf16.msra.mxu0 0
  %140 = vmatprep.subr.bf16.mxu0 0
  %141 = vmatpush1.bf16.msra.mxu0 %v125
  %142 = vmatprep.subr.bf16.mxu0 0
  %143 = vmatpush1.bf16.msra.mxu0 %v124
  %144 = vmatprep.subr.bf16.mxu0 0
  %145 = vmatpush2.bf16.msra.mxu0 0
  %146 = vmatprep.subr.bf16.mxu0 0
  %147 = vmatpush2.bf16.msra.mxu0 0
  %148 = vmatprep.subr.bf16.mxu0 0
  %149 = vmatpush2.bf16.msra.mxu0 0
  %150 = vmatprep.subr.bf16.mxu0 0
  %151 = vmatpush2.bf16.msra.mxu0 0
  %152 = vmatprep.subr.bf16.mxu0 0
  %153 = vmatpush2.bf16.msra.mxu0 0
  %154 = vmatprep.subr.bf16.mxu0 0
  %155 = vmatpush2.bf16.msra.mxu0 0
  %156 = vmatprep.subr.bf16.mxu0 0
  %157 = vmatpush2.bf16.msra.mxu0 0
  %158 = vmatprep.subr.bf16.mxu0 0
  %159 = vmatpush2.bf16.msra.mxu0 0
  %160 = vmatprep.mubr.bf16.mxu0 0
  %161 = vmatmul.mubr.bf16.gmra.mxu0 %v60
  %v162 = vpop.f32.mrf.mxu0
  %v163 = vadd.f32 0.0, %v162
  %v164 = vpop.f32.mrf.mxu0
  %v165 = vpop.f32.mrf.mxu0
  %v166 = vadd.f32 0.0, %v165
  %v167 = vpop.f32.mrf.mxu0
  %168 = vdwg.mxu0
  %v169 = vadd.f32 %v109, %v163
  %v170 = vadd.f32 %v110, %v166
  %171 = vst.msk [vmem:[%s108] sm:$0xff] %vm105, %v169
  %172 = vst.msk [vmem:[%s108 + $0x8] sm:$0xff] %vm105, %v170
  %s173 = scalar_lea.vmem [#allocation2], 32
  %v174 = vld [vmem:[%s173] sm:$0xff]
  %v175 = vld [vmem:[%s173 + $0x8] sm:$0xff]
  %s176 = scalar_lea.vmem %s1, 32
  %v177 = vld [vmem:[%s176] sm:$0xf]
  %v178 = vld [vmem:[%s176 + $0x4] sm:$0xf]
  %v179 = vld [vmem:[%s176 + $0x8] sm:$0xf]
  %v180 = vld [vmem:[%s176 + $0xc] sm:$0xf]
  %v185 = vunpack.c.l.b16 %v177
  %v186 = vunpack.c.l.b16 %v178
  %v187 = vunpack.c.l.b16 %v179
  %v188 = vunpack.c.l.b16 %v180
  %v189 = vpack.c.b16 %v186, %v185
  %v190 = vpack.c.b16 %v188, %v187
  %193 = vmatprep.subr.bf16.mxu0 0
  %194 = vmatpush1.bf16.msra.mxu0 0
  %195 = vmatprep.subr.bf16.mxu0 0
  %196 = vmatpush1.bf16.msra.mxu0 0
  %197 = vmatprep.subr.bf16.mxu0 0
  %198 = vmatpush1.bf16.msra.mxu0 0
  %199 = vmatprep.subr.bf16.mxu0 0
  %200 = vmatpush1.bf16.msra.mxu0 0
  %201 = vmatprep.subr.bf16.mxu0 0
  %202 = vmatpush1.bf16.msra.mxu0 0
  %203 = vmatprep.subr.bf16.mxu0 0
  %204 = vmatpush1.bf16.msra.mxu0 0
  %205 = vmatprep.subr.bf16.mxu0 0
  %206 = vmatpush1.bf16.msra.mxu0 %v190
  %207 = vmatprep.subr.bf16.mxu0 0
  %208 = vmatpush1.bf16.msra.mxu0 %v189
  %209 = vmatprep.subr.bf16.mxu0 0
  %210 = vmatpush2.bf16.msra.mxu0 0
  %211 = vmatprep.subr.bf16.mxu0 0
  %212 = vmatpush2.bf16.msra.mxu0 0
  %213 = vmatprep.subr.bf16.mxu0 0
  %214 = vmatpush2.bf16.msra.mxu0 0
  %215 = vmatprep.subr.bf16.mxu0 0
  %216 = vmatpush2.bf16.msra.mxu0 0
  %217 = vmatprep.subr.bf16.mxu0 0
  %218 = vmatpush2.bf16.msra.mxu0 0
  %219 = vmatprep.subr.bf16.mxu0 0
  %220 = vmatpush2.bf16.msra.mxu0 0
  %221 = vmatprep.subr.bf16.mxu0 0
  %222 = vmatpush2.bf16.msra.mxu0 0
  %223 = vmatprep.subr.bf16.mxu0 0
  %224 = vmatpush2.bf16.msra.mxu0 0
  %225 = vmatprep.mubr.bf16.mxu0 0
  %226 = vmatmul.mubr.bf16.gmra.mxu0 %v60
  %v227 = vpop.f32.mrf.mxu0
  %v228 = vadd.f32 0.0, %v227
  %v229 = vpop.f32.mrf.mxu0
  %v230 = vpop.f32.mrf.mxu0
  %v231 = vadd.f32 0.0, %v230
  %v232 = vpop.f32.mrf.mxu0
  %233 = vdwg.mxu0
  %v234 = vadd.f32 %v174, %v228
  %v235 = vadd.f32 %v175, %v231
  %236 = vst.msk [vmem:[%s173] sm:$0xff] %vm105, %v234
  %237 = vst.msk [vmem:[%s173 + $0x8] sm:$0xff] %vm105, %v235
  %s238 = scalar_lea.vmem [#allocation2], 48
  %v239 = vld [vmem:[%s238] sm:$0xff]
  %v240 = vld [vmem:[%s238 + $0x8] sm:$0xff]
  %s241 = scalar_lea.vmem %s1, 48
  %v242 = vld [vmem:[%s241] sm:$0xf]
  %v243 = vld [vmem:[%s241 + $0x4] sm:$0xf]
  %v244 = vld [vmem:[%s241 + $0x8] sm:$0xf]
  %v245 = vld [vmem:[%s241 + $0xc] sm:$0xf]
  %v250 = vunpack.c.l.b16 %v242
  %v251 = vunpack.c.l.b16 %v243
  %v252 = vunpack.c.l.b16 %v244
  %v253 = vunpack.c.l.b16 %v245
  %v254 = vpack.c.b16 %v251, %v250
  %v255 = vpack.c.b16 %v253, %v252
  %258 = vmatprep.subr.bf16.mxu0 0
  %259 = vmatpush1.bf16.msra.mxu0 0
  %260 = vmatprep.subr.bf16.mxu0 0
  %261 = vmatpush1.bf16.msra.mxu0 0
  %262 = vmatprep.subr.bf16.mxu0 0
  %263 = vmatpush1.bf16.msra.mxu0 0
  %264 = vmatprep.subr.bf16.mxu0 0
  %265 = vmatpush1.bf16.msra.mxu0 0
  %266 = vmatprep.subr.bf16.mxu0 0
  %267 = vmatpush1.bf16.msra.mxu0 0
  %268 = vmatprep.subr.bf16.mxu0 0
  %269 = vmatpush1.bf16.msra.mxu0 0
  %270 = vmatprep.subr.bf16.mxu0 0
  %271 = vmatpush1.bf16.msra.mxu0 %v255
  %272 = vmatprep.subr.bf16.mxu0 0
  %273 = vmatpush1.bf16.msra.mxu0 %v254
  %274 = vmatprep.subr.bf16.mxu0 0
  %275 = vmatpush2.bf16.msra.mxu0 0
  %276 = vmatprep.subr.bf16.mxu0 0
  %277 = vmatpush2.bf16.msra.mxu0 0
  %278 = vmatprep.subr.bf16.mxu0 0
  %279 = vmatpush2.bf16.msra.mxu0 0
  %280 = vmatprep.subr.bf16.mxu0 0
  %281 = vmatpush2.bf16.msra.mxu0 0
  %282 = vmatprep.subr.bf16.mxu0 0
  %283 = vmatpush2.bf16.msra.mxu0 0
  %284 = vmatprep.subr.bf16.mxu0 0
  %285 = vmatpush2.bf16.msra.mxu0 0
  %286 = vmatprep.subr.bf16.mxu0 0
  %287 = vmatpush2.bf16.msra.mxu0 0
  %288 = vmatprep.subr.bf16.mxu0 0
  %289 = vmatpush2.bf16.msra.mxu0 0
  %290 = vmatprep.mubr.bf16.mxu0 0
  %291 = vmatmul.mubr.bf16.gmra.mxu0 %v60
  %v292 = vpop.f32.mrf.mxu0
  %v293 = vadd.f32 0.0, %v292
  %v294 = vpop.f32.mrf.mxu0
  %v295 = vpop.f32.mrf.mxu0
  %v296 = vadd.f32 0.0, %v295
  %v297 = vpop.f32.mrf.mxu0
  %298 = vdwg.mxu0
  %v299 = vadd.f32 %v239, %v293
  %v300 = vadd.f32 %v240, %v296
  %301 = vst.msk [vmem:[%s238] sm:$0xff] %vm105, %v299
  %302 = vst.msk [vmem:[%s238 + $0x8] sm:$0xff] %vm105, %v300
  %s303 = scalar_lea.vmem [#allocation2], 64
  %v304 = vld [vmem:[%s303] sm:$0xff]
  %v305 = vld [vmem:[%s303 + $0x8] sm:$0xff]
  %s306 = scalar_lea.vmem %s1, 64
  %v307 = vld [vmem:[%s306] sm:$0xf]
  %v308 = vld [vmem:[%s306 + $0x4] sm:$0xf]
  %v309 = vld [vmem:[%s306 + $0x8] sm:$0xf]
  %v310 = vld [vmem:[%s306 + $0xc] sm:$0xf]
  %v315 = vunpack.c.l.b16 %v307
  %v316 = vunpack.c.l.b16 %v308
  %v317 = vunpack.c.l.b16 %v309
  %v318 = vunpack.c.l.b16 %v310
  %v319 = vpack.c.b16 %v316, %v315
  %v320 = vpack.c.b16 %v318, %v317
  %323 = vmatprep.subr.bf16.mxu0 0
  %324 = vmatpush1.bf16.msra.mxu0 0
  %325 = vmatprep.subr.bf16.mxu0 0
  %326 = vmatpush1.bf16.msra.mxu0 0
  %327 = vmatprep.subr.bf16.mxu0 0
  %328 = vmatpush1.bf16.msra.mxu0 0
  %329 = vmatprep.subr.bf16.mxu0 0
  %330 = vmatpush1.bf16.msra.mxu0 0
  %331 = vmatprep.subr.bf16.mxu0 0
  %332 = vmatpush1.bf16.msra.mxu0 0
  %333 = vmatprep.subr.bf16.mxu0 0
  %334 = vmatpush1.bf16.msra.mxu0 0
  %335 = vmatprep.subr.bf16.mxu0 0
  %336 = vmatpush1.bf16.msra.mxu0 %v320
  %337 = vmatprep.subr.bf16.mxu0 0
  %338 = vmatpush1.bf16.msra.mxu0 %v319
  %339 = vmatprep.subr.bf16.mxu0 0
  %340 = vmatpush2.bf16.msra.mxu0 0
  %341 = vmatprep.subr.bf16.mxu0 0
  %342 = vmatpush2.bf16.msra.mxu0 0
  %343 = vmatprep.subr.bf16.mxu0 0
  %344 = vmatpush2.bf16.msra.mxu0 0
  %345 = vmatprep.subr.bf16.mxu0 0
  %346 = vmatpush2.bf16.msra.mxu0 0
  %347 = vmatprep.subr.bf16.mxu0 0
  %348 = vmatpush2.bf16.msra.mxu0 0
  %349 = vmatprep.subr.bf16.mxu0 0
  %350 = vmatpush2.bf16.msra.mxu0 0
  %351 = vmatprep.subr.bf16.mxu0 0
  %352 = vmatpush2.bf16.msra.mxu0 0
  %353 = vmatprep.subr.bf16.mxu0 0
  %354 = vmatpush2.bf16.msra.mxu0 0
  %355 = vmatprep.mubr.bf16.mxu0 0
  %356 = vmatmul.mubr.bf16.gmra.mxu0 %v60
  %v357 = vpop.f32.mrf.mxu0
  %v358 = vadd.f32 0.0, %v357
  %v359 = vpop.f32.mrf.mxu0
  %v360 = vpop.f32.mrf.mxu0
  %v361 = vadd.f32 0.0, %v360
  %v362 = vpop.f32.mrf.mxu0
  %363 = vdwg.mxu0
  %v364 = vadd.f32 %v304, %v358
  %v365 = vadd.f32 %v305, %v361
  %366 = vst.msk [vmem:[%s303] sm:$0xff] %vm105, %v364
  %367 = vst.msk [vmem:[%s303 + $0x8] sm:$0xff] %vm105, %v365
  %s368 = scalar_lea.vmem [#allocation2], 80
  %v369 = vld [vmem:[%s368] sm:$0xff]
  %v370 = vld [vmem:[%s368 + $0x8] sm:$0xff]
  %s371 = scalar_lea.vmem %s1, 80
  %v372 = vld [vmem:[%s371] sm:$0xf]
  %v373 = vld [vmem:[%s371 + $0x4] sm:$0xf]
  %v374 = vld [vmem:[%s371 + $0x8] sm:$0xf]
  %v375 = vld [vmem:[%s371 + $0xc] sm:$0xf]
  %v380 = vunpack.c.l.b16 %v372
  %v381 = vunpack.c.l.b16 %v373
  %v382 = vunpack.c.l.b16 %v374
  %v383 = vunpack.c.l.b16 %v375
  %v384 = vpack.c.b16 %v381, %v380
  %v385 = vpack.c.b16 %v383, %v382
  %388 = vmatprep.subr.bf16.mxu0 0
  %389 = vmatpush1.bf16.msra.mxu0 0
  %390 = vmatprep.subr.bf16.mxu0 0
  %391 = vmatpush1.bf16.msra.mxu0 0
  %392 = vmatprep.subr.bf16.mxu0 0
  %393 = vmatpush1.bf16.msra.mxu0 0
  %394 = vmatprep.subr.bf16.mxu0 0
  %395 = vmatpush1.bf16.msra.mxu0 0
  %396 = vmatprep.subr.bf16.mxu0 0
  %397 = vmatpush1.bf16.msra.mxu0 0
  %398 = vmatprep.subr.bf16.mxu0 0
  %399 = vmatpush1.bf16.msra.mxu0 0
  %400 = vmatprep.subr.bf16.mxu0 0
  %401 = vmatpush1.bf16.msra.mxu0 %v385
  %402 = vmatprep.subr.bf16.mxu0 0
  %403 = vmatpush1.bf16.msra.mxu0 %v384
  %404 = vmatprep.subr.bf16.mxu0 0
  %405 = vmatpush2.bf16.msra.mxu0 0
  %406 = vmatprep.subr.bf16.mxu0 0
  %407 = vmatpush2.bf16.msra.mxu0 0
  %408 = vmatprep.subr.bf16.mxu0 0
  %409 = vmatpush2.bf16.msra.mxu0 0
  %410 = vmatprep.subr.bf16.mxu0 0
  %411 = vmatpush2.bf16.msra.mxu0 0
  %412 = vmatprep.subr.bf16.mxu0 0
  %413 = vmatpush2.bf16.msra.mxu0 0
  %414 = vmatprep.subr.bf16.mxu0 0
  %415 = vmatpush2.bf16.msra.mxu0 0
  %416 = vmatprep.subr.bf16.mxu0 0
  %417 = vmatpush2.bf16.msra.mxu0 0
  %418 = vmatprep.subr.bf16.mxu0 0
  %419 = vmatpush2.bf16.msra.mxu0 0
  %420 = vmatprep.mubr.bf16.mxu0 0
  %421 = vmatmul.mubr.bf16.gmra.mxu0 %v60
  %v422 = vpop.f32.mrf.mxu0
  %v423 = vadd.f32 0.0, %v422
  %v424 = vpop.f32.mrf.mxu0
  %v425 = vpop.f32.mrf.mxu0
  %v426 = vadd.f32 0.0, %v425
  %v427 = vpop.f32.mrf.mxu0
  %428 = vdwg.mxu0
  %v429 = vadd.f32 %v369, %v423
  %v430 = vadd.f32 %v370, %v426
  %431 = vst.msk [vmem:[%s368] sm:$0xff] %vm105, %v429
  %432 = vst.msk [vmem:[%s368 + $0x8] sm:$0xff] %vm105, %v430
  %s433 = scalar_lea.vmem [#allocation2], 96
  %v434 = vld [vmem:[%s433] sm:$0xff]
  %v435 = vld [vmem:[%s433 + $0x8] sm:$0xff]
  %s436 = scalar_lea.vmem %s1, 96
  %v437 = vld [vmem:[%s436] sm:$0xf]
  %v438 = vld [vmem:[%s436 + $0x4] sm:$0xf]
  %v439 = vld [vmem:[%s436 + $0x8] sm:$0xf]
  %v440 = vld [vmem:[%s436 + $0xc] sm:$0xf]
  %v445 = vunpack.c.l.b16 %v437
  %v446 = vunpack.c.l.b16 %v438
  %v447 = vunpack.c.l.b16 %v439
  %v448 = vunpack.c.l.b16 %v440
  %v449 = vpack.c.b16 %v446, %v445
  %v450 = vpack.c.b16 %v448, %v447
  %453 = vmatprep.subr.bf16.mxu0 0
  %454 = vmatpush1.bf16.msra.mxu0 0
  %455 = vmatprep.subr.bf16.mxu0 0
  %456 = vmatpush1.bf16.msra.mxu0 0
  %457 = vmatprep.subr.bf16.mxu0 0
  %458 = vmatpush1.bf16.msra.mxu0 0
  %459 = vmatprep.subr.bf16.mxu0 0
  %460 = vmatpush1.bf16.msra.mxu0 0
  %461 = vmatprep.subr.bf16.mxu0 0
  %462 = vmatpush1.bf16.msra.mxu0 0
  %463 = vmatprep.subr.bf16.mxu0 0
  %464 = vmatpush1.bf16.msra.mxu0 0
  %465 = vmatprep.subr.bf16.mxu0 0
  %466 = vmatpush1.bf16.msra.mxu0 %v450
  %467 = vmatprep.subr.bf16.mxu0 0
  %468 = vmatpush1.bf16.msra.mxu0 %v449
  %469 = vmatprep.subr.bf16.mxu0 0
  %470 = vmatpush2.bf16.msra.mxu0 0
  %471 = vmatprep.subr.bf16.mxu0 0
  %472 = vmatpush2.bf16.msra.mxu0 0
  %473 = vmatprep.subr.bf16.mxu0 0
  %474 = vmatpush2.bf16.msra.mxu0 0
  %475 = vmatprep.subr.bf16.mxu0 0
  %476 = vmatpush2.bf16.msra.mxu0 0
  %477 = vmatprep.subr.bf16.mxu0 0
  %478 = vmatpush2.bf16.msra.mxu0 0
  %479 = vmatprep.subr.bf16.mxu0 0
  %480 = vmatpush2.bf16.msra.mxu0 0
  %481 = vmatprep.subr.bf16.mxu0 0
  %482 = vmatpush2.bf16.msra.mxu0 0
  %483 = vmatprep.subr.bf16.mxu0 0
  %484 = vmatpush2.bf16.msra.mxu0 0
  %485 = vmatprep.mubr.bf16.mxu0 0
  %486 = vmatmul.mubr.bf16.gmra.mxu0 %v60
  %v487 = vpop.f32.mrf.mxu0
  %v488 = vadd.f32 0.0, %v487
  %v489 = vpop.f32.mrf.mxu0
  %v490 = vpop.f32.mrf.mxu0
  %v491 = vadd.f32 0.0, %v490
  %v492 = vpop.f32.mrf.mxu0
  %493 = vdwg.mxu0
  %v494 = vadd.f32 %v434, %v488
  %v495 = vadd.f32 %v435, %v491
  %496 = vst.msk [vmem:[%s433] sm:$0xff] %vm105, %v494
  %497 = vst.msk [vmem:[%s433 + $0x8] sm:$0xff] %vm105, %v495
  %s498 = scalar_lea.vmem [#allocation2], 112
  %v499 = vld [vmem:[%s498] sm:$0xff]
  %v500 = vld [vmem:[%s498 + $0x8] sm:$0xff]
  %s501 = scalar_lea.vmem %s1, 112
  %v502 = vld [vmem:[%s501] sm:$0xf]
  %v503 = vld [vmem:[%s501 + $0x4] sm:$0xf]
  %v504 = vld [vmem:[%s501 + $0x8] sm:$0xf]
  %v505 = vld [vmem:[%s501 + $0xc] sm:$0xf]
  %v510 = vunpack.c.l.b16 %v502
  %v511 = vunpack.c.l.b16 %v503
  %v512 = vunpack.c.l.b16 %v504
  %v513 = vunpack.c.l.b16 %v505
  %v514 = vpack.c.b16 %v511, %v510
  %v515 = vpack.c.b16 %v513, %v512
  %518 = vmatprep.subr.bf16.mxu0 0
  %519 = vmatpush1.bf16.msra.mxu0 0
  %520 = vmatprep.subr.bf16.mxu0 0
  %521 = vmatpush1.bf16.msra.mxu0 0
  %522 = vmatprep.subr.bf16.mxu0 0
  %523 = vmatpush1.bf16.msra.mxu0 0
  %524 = vmatprep.subr.bf16.mxu0 0
  %525 = vmatpush1.bf16.msra.mxu0 0
  %526 = vmatprep.subr.bf16.mxu0 0
  %527 = vmatpush1.bf16.msra.mxu0 0
  %528 = vmatprep.subr.bf16.mxu0 0
  %529 = vmatpush1.bf16.msra.mxu0 0
  %530 = vmatprep.subr.bf16.mxu0 0
  %531 = vmatpush1.bf16.msra.mxu0 %v515
  %532 = vmatprep.subr.bf16.mxu0 0
  %533 = vmatpush1.bf16.msra.mxu0 %v514
  %534 = vmatprep.subr.bf16.mxu0 0
  %535 = vmatpush2.bf16.msra.mxu0 0
  %536 = vmatprep.subr.bf16.mxu0 0
  %537 = vmatpush2.bf16.msra.mxu0 0
  %538 = vmatprep.subr.bf16.mxu0 0
  %539 = vmatpush2.bf16.msra.mxu0 0
  %540 = vmatprep.subr.bf16.mxu0 0
  %541 = vmatpush2.bf16.msra.mxu0 0
  %542 = vmatprep.subr.bf16.mxu0 0
  %543 = vmatpush2.bf16.msra.mxu0 0
  %544 = vmatprep.subr.bf16.mxu0 0
  %545 = vmatpush2.bf16.msra.mxu0 0
  %546 = vmatprep.subr.bf16.mxu0 0
  %547 = vmatpush2.bf16.msra.mxu0 0
  %548 = vmatprep.subr.bf16.mxu0 0
  %549 = vmatpush2.bf16.msra.mxu0 0
  %550 = vmatprep.mubr.bf16.mxu0 0
  %551 = vmatmul.mubr.bf16.gmra.mxu0 %v60
  %v552 = vpop.f32.mrf.mxu0
  %v553 = vadd.f32 0.0, %v552
  %v554 = vpop.f32.mrf.mxu0
  %v555 = vpop.f32.mrf.mxu0
  %v556 = vadd.f32 0.0, %v555
  %v557 = vpop.f32.mrf.mxu0
  %558 = vdwg.mxu0
  %v559 = vadd.f32 %v499, %v553
  %v560 = vadd.f32 %v500, %v556
  %561 = vst.msk [vmem:[%s498] sm:$0xff] %vm105, %v559
  %562 = vst.msk [vmem:[%s498 + $0x8] sm:$0xff] %vm105, %v560
  // Predicated region
  $region14: #{tpu_custom_call.1} parent=0 // pred_check
    %p563 = pneg %p12
  $region15: #{tpu_custom_call.1} parent=0 // pred_check_branch
    %565 = sbr.rel (%p563) target = $region17
  $region16: #{tpu_custom_call.1} parent=0 // pred_region
    %v566 = vld [vmem:[#allocation2] sm:$0xff]
    %v567 = vld [vmem:[#allocation2 + $0x8] sm:$0xff]
    %v568 = vld [vmem:[#allocation2 + $0x10] sm:$0xff]
    %v569 = vld [vmem:[#allocation2 + $0x18] sm:$0xff]
    %v570 = vld [vmem:[#allocation2 + $0x20] sm:$0xff]
    %v571 = vld [vmem:[#allocation2 + $0x28] sm:$0xff]
    %v572 = vld [vmem:[#allocation2 + $0x30] sm:$0xff]
    %v573 = vld [vmem:[#allocation2 + $0x38] sm:$0xff]
    %v574 = vld [vmem:[#allocation2 + $0x40] sm:$0xff]
    %v575 = vld [vmem:[#allocation2 + $0x48] sm:$0xff]
    %v576 = vld [vmem:[#allocation2 + $0x50] sm:$0xff]
    %v577 = vld [vmem:[#allocation2 + $0x58] sm:$0xff]
    %v578 = vld [vmem:[#allocation2 + $0x60] sm:$0xff]
    %v579 = vld [vmem:[#allocation2 + $0x68] sm:$0xff]
    %v580 = vld [vmem:[#allocation2 + $0x70] sm:$0xff]
    %v581 = vld [vmem:[#allocation2 + $0x78] sm:$0xff]
    %v582 = vpack.c.bf16 %v567, %v566
    %v583 = vpack.c.bf16 %v569, %v568
    %v584 = vpack.c.bf16 %v571, %v570
    %v585 = vpack.c.bf16 %v573, %v572
    %v586 = vpack.c.bf16 %v575, %v574
    %v587 = vpack.c.bf16 %v577, %v576
    %v588 = vpack.c.bf16 %v579, %v578
    %v589 = vpack.c.bf16 %v581, %v580
    %v598 = vunpack.c.l.b16 %v582
    %v599 = vunpack.c.h.b16 %v582
    %v600 = vunpack.c.l.b16 %v583
    %v601 = vunpack.c.h.b16 %v583
    %v602 = vunpack.c.l.b16 %v584
    %v603 = vunpack.c.h.b16 %v584
    %v604 = vunpack.c.l.b16 %v585
    %v605 = vunpack.c.h.b16 %v585
    %v606 = vunpack.c.l.b16 %v586
    %v607 = vunpack.c.h.b16 %v586
    %v608 = vunpack.c.l.b16 %v587
    %v609 = vunpack.c.h.b16 %v587
    %v610 = vunpack.c.l.b16 %v588
    %v611 = vunpack.c.h.b16 %v588
    %v612 = vunpack.c.l.b16 %v589
    %v613 = vunpack.c.h.b16 %v589
    %v614 = vpack.c.b16 %v598, %v598
    %v615 = vpack.c.b16 %v599, %v599
    %v616 = vpack.c.b16 %v600, %v600
    %v617 = vpack.c.b16 %v601, %v601
    %v618 = vpack.c.b16 %v602, %v602
    %v619 = vpack.c.b16 %v603, %v603
    %v620 = vpack.c.b16 %v604, %v604
    %v621 = vpack.c.b16 %v605, %v605
    %v622 = vpack.c.b16 %v606, %v606
    %v623 = vpack.c.b16 %v607, %v607
    %v624 = vpack.c.b16 %v608, %v608
    %v625 = vpack.c.b16 %v609, %v609
    %v626 = vpack.c.b16 %v610, %v610
    %v627 = vpack.c.b16 %v611, %v611
    %v628 = vpack.c.b16 %v612, %v612
    %v629 = vpack.c.b16 %v613, %v613
    %vm646 = vcmask 60416
    %647 = vst.msk [vmem:[%s2] sm:$0xf] %vm646, %v614
    %648 = vst.msk [vmem:[%s2 + $0x4] sm:$0xf] %vm646, %v615
    %649 = vst.msk [vmem:[%s2 + $0x8] sm:$0xf] %vm646, %v616
    %650 = vst.msk [vmem:[%s2 + $0xc] sm:$0xf] %vm646, %v617
    %651 = vst.msk [vmem:[%s2 + $0x10] sm:$0xf] %vm646, %v618
    %652 = vst.msk [vmem:[%s2 + $0x14] sm:$0xf] %vm646, %v619
    %653 = vst.msk [vmem:[%s2 + $0x18] sm:$0xf] %vm646, %v620
    %654 = vst.msk [vmem:[%s2 + $0x1c] sm:$0xf] %vm646, %v621
    %655 = vst.msk [vmem:[%s2 + $0x20] sm:$0xf] %vm646, %v622
    %656 = vst.msk [vmem:[%s2 + $0x24] sm:$0xf] %vm646, %v623
    %657 = vst.msk [vmem:[%s2 + $0x28] sm:$0xf] %vm646, %v624
    %658 = vst.msk [vmem:[%s2 + $0x2c] sm:$0xf] %vm646, %v625
    %659 = vst.msk [vmem:[%s2 + $0x30] sm:$0xf] %vm646, %v626
    %660 = vst.msk [vmem:[%s2 + $0x34] sm:$0xf] %vm646, %v627
    %661 = vst.msk [vmem:[%s2 + $0x38] sm:$0xf] %vm646, %v628
    %662 = vst.msk [vmem:[%s2 + $0x3c] sm:$0xf] %vm646, %v629
  $region17: #{tpu_custom_call.1} parent=0 // pred_fallthru
    _
  // Predicated region
  $region18: #{tpu_custom_call.1} parent=0 // pred_check
    _
  $region19: #{tpu_custom_call.1} parent=0 // pred_check_branch
    %664 = sbr.rel (0) target = $region21
  $region20: #{tpu_custom_call.1} parent=0 // pred_region
    _
  $region21: #{tpu_custom_call.1} parent=0 // pred_fallthru
    _
  // Predicated region
  $region22: #{tpu_custom_call.1} parent=0 // pred_check
    _
  $region23: #{tpu_custom_call.1} parent=0 // pred_check_branch
    %666 = sbr.rel (0) target = $region25
  $region24: #{tpu_custom_call.1} parent=0 // pred_region
    _
  $region25: #{tpu_custom_call.1} parent=0 // pred_fallthru
    _

</llo_original>
